<compile_context>
chip_gen: v7x
topology: tpu7x:2x2x1
jax: 0.10.0
libtpu: 0.0.40
codegen_flags: <defaults>
</compile_context>

<pallas_src>
import jax
import jax.numpy as jnp
from jax.experimental import pallas as pl
from jax.experimental.pallas import tpu as pltpu


def _round_up(x: int, m: int) -> int:
    return ((x + m - 1) // m) * m


def _residual_block_kernel(x_ref, w1_ref, w2_ref, o_ref):
    # x tile in its original dtype (kept for the exact residual add).
    x = x_ref[...]
    xb = x.astype(jnp.bfloat16)

    # h = ReLU(x @ W1.T); w1_ref holds W1.T (shape [C_in, C_out], bf16), so this
    # is a plain [M,K]x[K,N] MXU matmul with f32 accumulation.
    h = jnp.dot(xb, w1_ref[...], preferred_element_type=jnp.float32)
    h = jnp.maximum(h, 0.0).astype(jnp.bfloat16)

    # t = ReLU(h @ W2.T); w2_ref holds W2.T.
    t = jnp.dot(h, w2_ref[...], preferred_element_type=jnp.float32)
    t = jnp.maximum(t, 0.0)

    # Residual add in f32, cast back to the output dtype.
    o_ref[...] = (x.astype(jnp.float32) + t).astype(o_ref.dtype)


def _choose_tile_n(n_rows: int, requested) -> int:
    """Row-tile heuristic: big tiles (amortize ~0.35us/step), multiple of 8,
    and at least 2 grid steps when possible so v7x's 2 TCs both get work."""
    n8 = _round_up(max(n_rows, 1), 8)
    if requested is not None:
        return max(8, min(_round_up(requested, 8), n8))
    if n8 >= 1024:
        return 512                                   # >=2 steps, full MXU M dim
    if n_rows >= 16:
        return max(8, _round_up(-(-n_rows // 2), 8))  # split into ~2 steps
    return n8


def residual_block(x, w1, w2, *, tile_n=None):
    """Pallas equivalent of residual_block.forward.

    x:  [N, C]   activations
    w1: [C, C]   first  nn.Linear weight (torch [out, in] layout, no bias)
    w2: [C, C]   second nn.Linear weight (torch [out, in] layout, no bias)
    returns [N, C] with the same dtype as x.
    """
    N, C = x.shape
    assert w1.shape == (C, C), w1.shape
    assert w2.shape == (C, C), w2.shape

    # One-time HBM-side transpose + bf16 cast: kernel sees MXU-native [K, N].
    w1_t = jnp.transpose(w1).astype(jnp.bfloat16)
    w2_t = jnp.transpose(w2).astype(jnp.bfloat16)

    tile_n = _choose_tile_n(N, tile_n)
    grid = (pl.cdiv(N, tile_n),)

    x_isz = jnp.dtype(x.dtype).itemsize
    # Scheduler hint with actual dtype sizes (bf16 weights, x/out in x.dtype).
    cost = pl.CostEstimate(
        flops=4 * N * C * C,                      # two [N,C]x[C,C] matmuls
        transcendentals=0,
        bytes_accessed=2 * N * C * x_isz + 2 * C * C * 2,
    )

    # Explicit VMEM budget (don't rely on the 16/32 MiB default scoped limit):
    # weights (bf16, double-buffered), x/out tiles (double-buffered), and the
    # f32/bf16 intermediates, with ~50% headroom.
    wt_bytes = 2 * 2 * C * C * 2
    io_bytes = 2 * tile_n * C * x_isz * 2
    tmp_bytes = 4 * tile_n * C * 4
    vmem_limit = int(1.5 * (wt_bytes + io_bytes + tmp_bytes)) + (1 << 20)
    vmem_limit = max(32 << 20, min(vmem_limit, 96 << 20))

    out = pl.pallas_call(
        _residual_block_kernel,
        out_shape=jax.ShapeDtypeStruct((N, C), x.dtype),
        grid_spec=pltpu.PrefetchScalarGridSpec(
            num_scalar_prefetch=0,
            grid=grid,
            in_specs=[
                # x tile: pipelined over the row grid; ragged tail masked by Pallas.
                pl.BlockSpec((tile_n, C), lambda i: (i, 0)),
                # Weights: constant block index -> fetched once, VMEM resident.
                pl.BlockSpec((C, C), lambda i: (0, 0)),
                pl.BlockSpec((C, C), lambda i: (0, 0)),
            ],
            out_specs=pl.BlockSpec((tile_n, C), lambda i: (i, 0)),
        ),
        compiler_params=pltpu.CompilerParams(
            dimension_semantics=("parallel",),
            vmem_limit_bytes=vmem_limit,
        ),
        cost_estimate=cost,
    )(x, w1_t, w2_t)

    return out


if __name__ == "__main__":
    # Small shapes consistent with the module: nChn=128 (lane-aligned), batch=40.
    # tile_n=16 exercises multiple grid steps plus the ragged (masked) tail tile.
    n_chn, batch = 128, 40

    key = jax.random.PRNGKey(0)
    kx, k1, k2 = jax.random.split(key, 3)

    x = jax.random.normal(kx, (batch, n_chn), dtype=jnp.float32)
    bound = 1.0 / (n_chn ** 0.5)
    w1 = jax.random.uniform(k1, (n_chn, n_chn), minval=-bound, maxval=bound,
                            dtype=jnp.float32)
    w2 = jax.random.uniform(k2, (n_chn, n_chn), minval=-bound, maxval=bound,
                            dtype=jnp.float32)

    out = residual_block(x, w1, w2, tile_n=16)
    jax.block_until_ready(out)

    # Reference mirroring the kernel's bf16-matmul / f32-accumulate math.
    xb = x.astype(jnp.bfloat16)
    w1b = w1.astype(jnp.bfloat16)
    w2b = w2.astype(jnp.bfloat16)
    h_ref = jnp.maximum(jnp.dot(xb, w1b.T, preferred_element_type=jnp.float32), 0.0)
    t_ref = jnp.maximum(jnp.dot(h_ref.astype(jnp.bfloat16), w2b.T,
                                preferred_element_type=jnp.float32), 0.0)
    ref_bf16 = x + t_ref

    # Full-f32 reference of the original PyTorch math (loose sanity check).
    h32 = jnp.maximum(x @ w1.T, 0.0)
    ref_f32 = x + jnp.maximum(h32 @ w2.T, 0.0)

    assert out.shape == (batch, n_chn)
    assert out.dtype == x.dtype
    assert jnp.allclose(out, ref_bf16, atol=1e-2, rtol=1e-2)
    assert jnp.allclose(out, ref_f32, atol=1e-1, rtol=1e-1)

    print("KERNEL_OK")
</pallas_src>

<mosaic_0001>
module attributes {stable_mosaic.version = 11 : i64} {
  func.func @_residual_block_kernel(%arg0: i32, %arg1: memref<16x128xf32, #tpu.memory_space<vmem>>, %arg2: memref<128x128xbf16, #tpu.memory_space<vmem>>, %arg3: memref<128x128xbf16, #tpu.memory_space<vmem>>, %arg4: memref<16x128xf32, #tpu.memory_space<vmem>>) attributes {dimension_semantics = [#tpu.dimension_semantics<parallel>], iteration_bounds = array<i64: 3>, scalar_prefetch = 0 : i64, scratch_operands = 0 : i64, tpu.core_type = #tpu.core_type<tc>, window_params = [{transform_indices = @transform_0, window_bounds = array<i64: 16, 128>}, {pipeline_mode = #tpu.pipeline_mode<synchronous>, transform_indices = @transform_1, window_bounds = array<i64: 128, 128>}, {pipeline_mode = #tpu.pipeline_mode<synchronous>, transform_indices = @transform_2, window_bounds = array<i64: 128, 128>}, {transform_indices = @transform_3, window_bounds = array<i64: 16, 128>}]} {
    %c0 = arith.constant 0 : index
    %c0_0 = arith.constant 0 : index
    %0 = vector.load %arg1[%c0, %c0_0] : memref<16x128xf32, #tpu.memory_space<vmem>>, vector<16x128xf32>
    %1 = arith.truncf %0 : vector<16x128xf32> to vector<16x128xbf16>
    %c0_1 = arith.constant 0 : index
    %c0_2 = arith.constant 0 : index
    %2 = vector.load %arg2[%c0_1, %c0_2] : memref<128x128xbf16, #tpu.memory_space<vmem>>, vector<128x128xbf16>
    %cst = arith.constant dense<0.000000e+00> : vector<16x128xf32>
    %3 = tpu.matmul %1, %2, %cst {dimension_numbers = #tpu.dot_dimension_numbers<[1], [0], [0], [1], [0, 0, 1, 1], [], []>} : vector<16x128xbf16>, vector<128x128xbf16>, vector<16x128xf32> -> vector<16x128xf32>
    %cst_3 = arith.constant 0.000000e+00 : f32
    %4 = vector.broadcast %cst_3 : f32 to vector<16x128xf32>
    %5 = arith.maximumf %3, %4 : vector<16x128xf32>
    %6 = arith.truncf %5 : vector<16x128xf32> to vector<16x128xbf16>
    %c0_4 = arith.constant 0 : index
    %c0_5 = arith.constant 0 : index
    %7 = vector.load %arg3[%c0_4, %c0_5] : memref<128x128xbf16, #tpu.memory_space<vmem>>, vector<128x128xbf16>
    %cst_6 = arith.constant dense<0.000000e+00> : vector<16x128xf32>
    %8 = tpu.matmul %6, %7, %cst_6 {dimension_numbers = #tpu.dot_dimension_numbers<[1], [0], [0], [1], [0, 0, 1, 1], [], []>} : vector<16x128xbf16>, vector<128x128xbf16>, vector<16x128xf32> -> vector<16x128xf32>
    %cst_7 = arith.constant 0.000000e+00 : f32
    %9 = vector.broadcast %cst_7 : f32 to vector<16x128xf32>
    %10 = arith.maximumf %8, %9 : vector<16x128xf32>
    %11 = arith.addf %0, %10 : vector<16x128xf32>
    %c0_8 = arith.constant 0 : index
    %c0_9 = arith.constant 0 : index
    %12 = vector.load %arg4[%c0_8, %c0_9] : memref<16x128xf32, #tpu.memory_space<vmem>>, vector<16x128xf32>
    tpu.vector_store %arg4[%c0_8, %c0_9], %11 {strides = array<i32>} : memref<16x128xf32, #tpu.memory_space<vmem>>, vector<16x128xf32>,
    return
  }
  func.func @transform_0(%arg0: i32) -> (i32, i32) {
    %c0_i32 = arith.constant 0 : i32
    %c0_i32_0 = arith.constant 0 : i32
    return %arg0, %c0_i32 : i32, i32
  }
  func.func @transform_1(%arg0: i32) -> (i32, i32) {
    %c0_i32 = arith.constant 0 : i32
    %c0_i32_0 = arith.constant 0 : i32
    %c0_i32_1 = arith.constant 0 : i32
    return %c0_i32, %c0_i32_0 : i32, i32
  }
  func.func @transform_2(%arg0: i32) -> (i32, i32) {
    %c0_i32 = arith.constant 0 : i32
    %c0_i32_0 = arith.constant 0 : i32
    %c0_i32_1 = arith.constant 0 : i32
    return %c0_i32, %c0_i32_0 : i32, i32
  }
  func.func @transform_3(%arg0: i32) -> (i32, i32) {
    %c0_i32 = arith.constant 0 : i32
    %c0_i32_0 = arith.constant 0 : i32
    return %arg0, %c0_i32 : i32, i32
  }
}

</mosaic_0001>

<llo_original>
// kernel: tpu_custom_call.1
$region0: #{tpu_custom_call.1}
  #allocation0 [shape = 'u32[]', space=smem, size = 0x4, offset = 0x4, fixed_abs, tag = 'smem constant byte address 0x4 - core index']
  #allocation1 [shape = 'u32[144,128]{1,0:T(1,128)}', space=vmem, size = 0x12000, scoped, tag = 'internal scratch']
  %s0 = inlined_call_operand.hbm [shape: f32[40,128], index: 0, kind: input, shape index: {}]
  %s1 = inlined_call_operand.hbm [shape: bf16[128,128], index: 1, kind: input, shape index: {}]
  %s2 = inlined_call_operand.hbm [shape: bf16[128,128], index: 2, kind: input, shape index: {}]
  %s3 = inlined_call_operand.hbm [shape: f32[40,128], index: 3, kind: output, shape index: {}]
  %s4 = sld [smem:[#allocation0]]
  $region57: #{tpu_custom_call.1} parent=0
    _
  %s6 = ssub.s32 1, %s4
  %s7 = scalar_select 0, %s6, %s4
  $region1: #{tpu_custom_call.1} parent=0
    #allocation2 [shape = 'u8[16384]{0}', space=vmem, size = 0x4000, scoped, tag = 'input window, operand 0']
    #allocation3 [shape = 's32[2]{0}', space=sflag, size = 0x8, scoped, tag = 'scoped memory for tpu_custom_call.1']
    #allocation4 [shape = 's32[2]{0}', space=sflag, size = 0x8, scoped, tag = 'scoped memory for tpu_custom_call.1']
    #allocation5 [shape = 'u8[32768]{0}', space=vmem, size = 0x8000, scoped, tag = 'input window, operand 1, single buffered']
    #allocation6 [shape = 's32[1]{0}', space=sflag, size = 0x4, scoped, tag = 'scoped memory for tpu_custom_call.1']
    #allocation7 [shape = 'u8[32768]{0}', space=vmem, size = 0x8000, scoped, tag = 'input window, operand 2, single buffered']
    #allocation8 [shape = 'u8[16384]{0}', space=vmem, size = 0x4000, scoped, tag = 'output window, operand 0']
    %8 = vsyncpa [#allocation3], 0
    %s9 = scalar_lea.sflag [#allocation3], 1
    %10 = vsyncpa %s9, 0
    %11 = vsyncpa [#allocation6], 0
    %12 = vsyncpa [#allocation4], 0
    %s13 = scalar_lea.sflag [#allocation4], 1
    %14 = vsyncpa %s13, 0
    loop: start=0, step=1, limit=5
    $region2: #{tpu_custom_call.1} parent=1 // loop_pre_header
      _
    $region3: #{tpu_custom_call.1} parent=1 // loop_header
      %s16 = sphi 0, %s20
      %p17 = scmp.ge.s32.totalorder %s16, 5
      %s26 = sphi 0, %s28
      %s29 = sphi 0, %s26
      %s30 = sphi 0, %s29
      %s46 = sphi 0, %s30
      %s50 = sphi 0, %s50
      %s52 = sphi 0, %s50
      %s53 = sphi 0, %s52
      %s67 = sphi 0, %s53
      %s71 = sphi 0, %s71
      %s73 = sphi 0, %s71
      %s74 = sphi 0, %s73
      %s88 = sphi 0, %s74
      %s94 = sphi 0, %s96
      %s97 = sphi 0, %s94
      %s98 = sphi 0, %s97
      %s114 = sphi 0, %s98
    $region4: #{tpu_custom_call.1} parent=1 // loop_header_branch
      %19 = sbr.rel (%p17) target = $region8
    $region5: #{tpu_custom_call.1} parent=1 // loop_body
      %s21 = ssub.s32 %s16, 1
      %s22 = ssub.s32 %s16, 2
      %s23 = sadd.s32 %s16, 1
      %s24 = ssub.s32 %s16, %s23
      %p25 = scmp.eq.s32.totalorder %s24, 0
      %s27 = sadd.s32 %s26, 1
      %s28 = scalar_select %p25, %s26, %s27
      %p31 = pneg %p25
      %p32 = scmp.eq.s32.totalorder %s16, 2
      %p33 = por %p31, %p32
      %p34 = scmp.ne.s32.totalorder %s26, %s29
      %p35 = scmp.eq.s32.totalorder %s16, 0
      %p36 = por %p34, %p35
      %p37 = scmp.ne.s32.totalorder %s26, %s29
      %p38 = scmp.eq.s32.totalorder %s21, 2
      %p39 = por %p37, %p38
      %p40 = scmp.ne.s32.totalorder %s29, %s30
      %p41 = scmp.eq.s32.totalorder %s21, 0
      %p42 = por %p40, %p41
      %p43 = scmp.ne.s32.totalorder %s29, %s30
      %p44 = scmp.eq.s32.totalorder %s22, 2
      %p45 = por %p43, %p44
      %p47 = scmp.ne.s32.totalorder %s30, %s46
      %p48 = scmp.eq.s32.totalorder %s22, 0
      %p49 = por %p47, %p48
      %s51 = sadd.s32 %s50, 1
      %p54 = scmp.eq.s32.totalorder %s16, 2
      %p55 = scmp.ne.s32.totalorder %s50, %s52
      %p56 = scmp.eq.s32.totalorder %s16, 0
      %p57 = por %p55, %p56
      %p58 = scmp.ne.s32.totalorder %s50, %s52
      %p59 = scmp.eq.s32.totalorder %s21, 2
      %p60 = por %p58, %p59
      %p61 = scmp.ne.s32.totalorder %s52, %s53
      %p62 = scmp.eq.s32.totalorder %s21, 0
      %p63 = por %p61, %p62
      %p64 = scmp.ne.s32.totalorder %s52, %s53
      %p65 = scmp.eq.s32.totalorder %s22, 2
      %p66 = por %p64, %p65
      %p68 = scmp.ne.s32.totalorder %s53, %s67
      %p69 = scmp.eq.s32.totalorder %s22, 0
      %p70 = por %p68, %p69
      %s72 = sadd.s32 %s71, 1
      %p75 = scmp.eq.s32.totalorder %s16, 2
      %p76 = scmp.ne.s32.totalorder %s71, %s73
      %p77 = scmp.eq.s32.totalorder %s16, 0
      %p78 = por %p76, %p77
      %p79 = scmp.ne.s32.totalorder %s71, %s73
      %p80 = scmp.eq.s32.totalorder %s21, 2
      %p81 = por %p79, %p80
      %p82 = scmp.ne.s32.totalorder %s73, %s74
      %p83 = scmp.eq.s32.totalorder %s21, 0
      %p84 = por %p82, %p83
      %p85 = scmp.ne.s32.totalorder %s73, %s74
      %p86 = scmp.eq.s32.totalorder %s22, 2
      %p87 = por %p85, %p86
      %p89 = scmp.ne.s32.totalorder %s74, %s88
      %p90 = scmp.eq.s32.totalorder %s22, 0
      %p91 = por %p89, %p90
      %s92 = ssub.s32 %s16, %s23
      %p93 = scmp.eq.s32.totalorder %s92, 0
      %s95 = sadd.s32 %s94, 1
      %s96 = scalar_select %p93, %s94, %s95
      %p99 = pneg %p93
      %p100 = scmp.eq.s32.totalorder %s16, 2
      %p101 = por %p99, %p100
      %p102 = scmp.ne.s32.totalorder %s94, %s97
      %p103 = scmp.eq.s32.totalorder %s16, 0
      %p104 = por %p102, %p103
      %p105 = scmp.ne.s32.totalorder %s94, %s97
      %p106 = scmp.eq.s32.totalorder %s21, 2
      %p107 = por %p105, %p106
      %p108 = scmp.ne.s32.totalorder %s97, %s98
      %p109 = scmp.eq.s32.totalorder %s21, 0
      %p110 = por %p108, %p109
      %p111 = scmp.ne.s32.totalorder %s97, %s98
      %p112 = scmp.eq.s32.totalorder %s22, 2
      %p113 = por %p111, %p112
      %p115 = scmp.ne.s32.totalorder %s98, %s114
      %p116 = scmp.eq.s32.totalorder %s22, 0
      %p117 = por %p115, %p116
      %p118 = scmp.le.s32.totalorder 1, %s16
      %p119 = scmp.lt.s32.totalorder %s16, 4
      %p120 = pnand %p118, %p119
      %p121 = pneg %p120
      // Predicated region
      $region9: #{tpu_custom_call.1} parent=5 // pred_check
        _
      $region10: #{tpu_custom_call.1} parent=5 // pred_check_branch
        %123 = sbr.rel (%p120) target = $region12
      $region11: #{tpu_custom_call.1} parent=5 // pred_region
        %s124 = ssub.s32 %s16, 1
        // Predicated region
        $region13: #{tpu_custom_call.1} parent=11 // pred_check
          %p125 = pneg %p63
        $region14: #{tpu_custom_call.1} parent=11 // pred_check_branch
          %127 = sbr.rel (%p125) target = $region16
        $region15: #{tpu_custom_call.1} parent=11 // pred_region
          %s129 = ssub.s32 1024, 1024
          %130 = vsyncadd [#allocation6], %s129
          %s131 = sshll.u32 [#allocation5], 4
          %s132 = int_to_ptr.vmem [resolvable:$true] %s131
          %137 = dma.hbm_to_vmem [thread:$0]  %s1, 1024, %s132, [#allocation6], 64, 64, 4
        $region16: #{tpu_custom_call.1} parent=11 // pred_fallthru
          _
        // Predicated region
        $region17: #{tpu_custom_call.1} parent=11 // pred_check
          %p138 = pneg %p84
        $region18: #{tpu_custom_call.1} parent=11 // pred_check_branch
          %140 = sbr.rel (%p138) target = $region20
        $region19: #{tpu_custom_call.1} parent=11 // pred_region
          %s142 = ssub.s32 1024, 1024
          %143 = vsyncadd [#allocation6], %s142
          %s144 = sshll.u32 [#allocation7], 4
          %s145 = int_to_ptr.vmem [resolvable:$true] %s144
          %150 = dma.hbm_to_vmem [thread:$0]  %s2, 1024, %s145, [#allocation6], 64, 64, 4
        $region20: #{tpu_custom_call.1} parent=11 // pred_fallthru
          _
      $region12: #{tpu_custom_call.1} parent=5 // pred_fallthru
        _
      %p151 = scmp.lt.s32.totalorder %s16, 3
      // Predicated region
      $region21: #{tpu_custom_call.1} parent=5 // pred_check
        %p152 = pneg %p151
      $region22: #{tpu_custom_call.1} parent=5 // pred_check_branch
        %154 = sbr.rel (%p152) target = $region24
      $region23: #{tpu_custom_call.1} parent=5 // pred_region
        // Predicated region
        $region25: #{tpu_custom_call.1} parent=23 // pred_check
          %p155 = pneg %p36
        $region26: #{tpu_custom_call.1} parent=23 // pred_check_branch
          %157 = sbr.rel (%p155) target = $region28
        $region27: #{tpu_custom_call.1} parent=23 // pred_region
          %s158 = sand.u32 %s26, 1
          %s159 = scalar_lea.sflag [#allocation3], %s158
          %s160 = sand.u32 %s26, 1
          %s161 = smul.addr %s160, 16
          %s162 = scalar_lea.vmem [#allocation2], %s161
          %s163 = smul.u32 2, %s16
          %s164 = ssub.s32 5, %s163
          %p165 = scmp.lt.s32.totalorder %s164, 2
          %s166 = scalar_select %p165, %s164, 2
          %s167 = smul.u32 128, %s166
          %s169 = ssub.s32 256, %s167
          %170 = vsyncadd %s159, %s169
          %p171 = scmp.ne.s32.totalorder 0, %s167
          %s172 = smul.addr %s163, 128
          %s173 = scalar_lea.hbm %s0, %s172
          %s174 = smul.u32 8, %s166
          %s175 = sshll.u32 %s162, 4
          %s176 = int_to_ptr.vmem [resolvable:$true] %s175
          %s177 = sshll.u32 %s174, 4
          %181 = dma.hbm_to_vmem [thread:$0]  (%p171), %s173, %s177, %s176, %s159, 128, 128, 8
        $region28: #{tpu_custom_call.1} parent=23 // pred_fallthru
          _
      $region24: #{tpu_custom_call.1} parent=5 // pred_fallthru
        _
      %p182 = scmp.le.s32.totalorder 1, %s16
      %p183 = scmp.lt.s32.totalorder %s16, 4
      %p184 = pnand %p182, %p183
      %p185 = pneg %p184
      // Predicated region
      $region29: #{tpu_custom_call.1} parent=5 // pred_check
        _
      $region30: #{tpu_custom_call.1} parent=5 // pred_check_branch
        %187 = sbr.rel (%p184) target = $region32
      $region31: #{tpu_custom_call.1} parent=5 // pred_region
        %s188 = ssub.s32 %s16, 1
        %s189 = sand.u32 %s29, 1
        %s190 = scalar_lea.sflag [#allocation3], %s189
        %s191 = sand.u32 %s29, 1
        %s192 = smul.addr %s191, 16
        %s193 = scalar_lea.vmem [#allocation2], %s192
        // Predicated region
        $region33: #{tpu_custom_call.1} parent=31 // pred_check
          %p194 = pneg %p42
        $region34: #{tpu_custom_call.1} parent=31 // pred_check_branch
          %196 = sbr.rel (%p194) target = $region36
        $region35: #{tpu_custom_call.1} parent=31 // pred_region
          %197 = dma.done %s190, 256
        $region36: #{tpu_custom_call.1} parent=31 // pred_fallthru
          _
        // Predicated region
        $region37: #{tpu_custom_call.1} parent=31 // pred_check
          %p198 = pneg %p63
        $region38: #{tpu_custom_call.1} parent=31 // pred_check_branch
          %200 = sbr.rel (%p198) target = $region40
        $region39: #{tpu_custom_call.1} parent=31 // pred_region
          %201 = dma.done [#allocation6], 1024
        $region40: #{tpu_custom_call.1} parent=31 // pred_fallthru
          _
        // Predicated region
        $region41: #{tpu_custom_call.1} parent=31 // pred_check
          %p202 = pneg %p84
        $region42: #{tpu_custom_call.1} parent=31 // pred_check_branch
          %204 = sbr.rel (%p202) target = $region44
        $region43: #{tpu_custom_call.1} parent=31 // pred_region
          %205 = dma.done [#allocation6], 1024
        $region44: #{tpu_custom_call.1} parent=31 // pred_fallthru
          _
        %s206 = sand.u32 %s29, 1
        %s207 = scalar_lea.sflag [#allocation3], %s206
        %s208 = sand.u32 %s29, 1
        %s209 = smul.addr %s208, 16
        %s210 = scalar_lea.vmem [#allocation2], %s209
        %p211 = pneg %p42
        %p212 = pneg %p39
        %p213 = pneg %p63
        %p214 = pneg %p60
        %p215 = pneg %p84
        %p216 = pneg %p81
        %p217 = pneg %p110
        %p218 = pneg %p107
        %s219 = sand.u32 %s97, 1
        %s220 = scalar_lea.sflag [#allocation4], %s219
        %s221 = sand.u32 %s97, 1
        %s222 = smul.addr %s221, 16
        %s223 = scalar_lea.vmem [#allocation8], %s222
        %s224 = smul.u32 2, %s21
        %s225 = ssub.s32 5, %s224
        %p226 = scmp.lt.s32.totalorder %s225, 2
        %s227 = scalar_select %p226, %s225, 2
        %s228 = smul.u32 128, %s227
        %s229 = smul.u32 2, %s21
        %s230 = ssub.s32 5, %s229
        %p231 = scmp.lt.s32.totalorder %s230, 2
        %s232 = scalar_select %p231, %s230, 2
        %s233 = smul.u32 128, %s232
        %v235 = vld [vmem:[%s193] sm:$0xff]
        %v236 = vld [vmem:[%s193 + $0x8] sm:$0xff]
        %v237 = vpack.c.bf16 %v236, %v235
        %v238 = vld [vmem:[#allocation5] sm:$0xf]
        %v239 = vld [vmem:[#allocation5 + $0x4] sm:$0xf]
        %v240 = vld [vmem:[#allocation5 + $0x8] sm:$0xf]
        %v241 = vld [vmem:[#allocation5 + $0xc] sm:$0xf]
        %v242 = vld [vmem:[#allocation5 + $0x10] sm:$0xf]
        %v243 = vld [vmem:[#allocation5 + $0x14] sm:$0xf]
        %v244 = vld [vmem:[#allocation5 + $0x18] sm:$0xf]
        %v245 = vld [vmem:[#allocation5 + $0x1c] sm:$0xf]
        %v246 = vld [vmem:[#allocation5 + $0x20] sm:$0xf]
        %v247 = vld [vmem:[#allocation5 + $0x24] sm:$0xf]
        %v248 = vld [vmem:[#allocation5 + $0x28] sm:$0xf]
        %v249 = vld [vmem:[#allocation5 + $0x2c] sm:$0xf]
        %v250 = vld [vmem:[#allocation5 + $0x30] sm:$0xf]
        %v251 = vld [vmem:[#allocation5 + $0x34] sm:$0xf]
        %v252 = vld [vmem:[#allocation5 + $0x38] sm:$0xf]
        %v253 = vld [vmem:[#allocation5 + $0x3c] sm:$0xf]
        %v270 = vunpack.c.l.b16 %v238
        %v271 = vunpack.c.l.b16 %v239
        %v272 = vunpack.c.l.b16 %v240
        %v273 = vunpack.c.l.b16 %v241
        %v274 = vunpack.c.l.b16 %v242
        %v275 = vunpack.c.l.b16 %v243
        %v276 = vunpack.c.l.b16 %v244
        %v277 = vunpack.c.l.b16 %v245
        %v278 = vunpack.c.l.b16 %v246
        %v279 = vunpack.c.l.b16 %v247
        %v280 = vunpack.c.l.b16 %v248
        %v281 = vunpack.c.l.b16 %v249
        %v282 = vunpack.c.l.b16 %v250
        %v283 = vunpack.c.l.b16 %v251
        %v284 = vunpack.c.l.b16 %v252
        %v285 = vunpack.c.l.b16 %v253
        %v286 = vpack.c.b16 %v271, %v270
        %v287 = vpack.c.b16 %v273, %v272
        %v288 = vpack.c.b16 %v275, %v274
        %v289 = vpack.c.b16 %v277, %v276
        %v290 = vpack.c.b16 %v279, %v278
        %v291 = vpack.c.b16 %v281, %v280
        %v292 = vpack.c.b16 %v283, %v282
        %v293 = vpack.c.b16 %v285, %v284
        %302 = vmatprep.subr.bf16.mxu0 0
        %303 = vmatpush1.bf16.msra.mxu0 %v286
        %304 = vmatprep.subr.bf16.mxu0 0
        %305 = vmatpush1.bf16.msra.mxu0 %v287
        %306 = vmatprep.subr.bf16.mxu0 0
        %307 = vmatpush1.bf16.msra.mxu0 %v288
        %308 = vmatprep.subr.bf16.mxu0 0
        %309 = vmatpush1.bf16.msra.mxu0 %v289
        %310 = vmatprep.subr.bf16.mxu0 0
        %311 = vmatpush1.bf16.msra.mxu0 %v290
        %312 = vmatprep.subr.bf16.mxu0 0
        %313 = vmatpush1.bf16.msra.mxu0 %v291
        %314 = vmatprep.subr.bf16.mxu0 0
        %315 = vmatpush1.bf16.msra.mxu0 %v292
        %316 = vmatprep.subr.bf16.mxu0 0
        %317 = vmatpush1.bf16.msra.mxu0 %v293
        %318 = vmatprep.subr.bf16.mxu0 0
        %319 = vmatpush1.bf16.msra.mxu0 0
        %320 = vmatprep.subr.bf16.mxu0 0
        %321 = vmatpush1.bf16.msra.mxu0 0
        %322 = vmatprep.subr.bf16.mxu0 0
        %323 = vmatpush1.bf16.msra.mxu0 0
        %324 = vmatprep.subr.bf16.mxu0 0
        %325 = vmatpush1.bf16.msra.mxu0 0
        %326 = vmatprep.subr.bf16.mxu0 0
        %327 = vmatpush1.bf16.msra.mxu0 0
        %328 = vmatprep.subr.bf16.mxu0 0
        %329 = vmatpush1.bf16.msra.mxu0 0
        %330 = vmatprep.subr.bf16.mxu0 0
        %331 = vmatpush1.bf16.msra.mxu0 0
        %332 = vmatprep.subr.bf16.mxu0 0
        %333 = vmatpush1.bf16.msra.mxu0 0
        %334 = vmatprep.mubr.bf16.mxu0 0
        %335 = vmatmul.mubr.bf16.gmra.mrb[0].mxu0 %v237
        %v336 = vpop.f32.mrb[0].mxu0
        %v337 = vadd.f32 0.0, %v336
        %v338 = vpop.f32.mrb[0].mxu0
        %v339 = vpop.f32.mrb[0].mxu0
        %v340 = vadd.f32 0.0, %v339
        %v341 = vpop.f32.mrb[0].mxu0
        %342 = vdwg.mxu0
        %v343 = vmax.f32 %v337, 0.0
        %v344 = vmax.f32 %v340, 0.0
        %v345 = vpack.c.bf16 %v344, %v343
        %v346 = vld [vmem:[#allocation7] sm:$0xf]
        %v347 = vld [vmem:[#allocation7 + $0x4] sm:$0xf]
        %v348 = vld [vmem:[#allocation7 + $0x8] sm:$0xf]
        %v349 = vld [vmem:[#allocation7 + $0xc] sm:$0xf]
        %v350 = vld [vmem:[#allocation7 + $0x10] sm:$0xf]
        %v351 = vld [vmem:[#allocation7 + $0x14] sm:$0xf]
        %v352 = vld [vmem:[#allocation7 + $0x18] sm:$0xf]
        %v353 = vld [vmem:[#allocation7 + $0x1c] sm:$0xf]
        %v354 = vld [vmem:[#allocation7 + $0x20] sm:$0xf]
        %v355 = vld [vmem:[#allocation7 + $0x24] sm:$0xf]
        %v356 = vld [vmem:[#allocation7 + $0x28] sm:$0xf]
        %v357 = vld [vmem:[#allocation7 + $0x2c] sm:$0xf]
        %v358 = vld [vmem:[#allocation7 + $0x30] sm:$0xf]
        %v359 = vld [vmem:[#allocation7 + $0x34] sm:$0xf]
        %v360 = vld [vmem:[#allocation7 + $0x38] sm:$0xf]
        %v361 = vld [vmem:[#allocation7 + $0x3c] sm:$0xf]
        %v378 = vunpack.c.l.b16 %v346
        %v379 = vunpack.c.l.b16 %v347
        %v380 = vunpack.c.l.b16 %v348
        %v381 = vunpack.c.l.b16 %v349
        %v382 = vunpack.c.l.b16 %v350
        %v383 = vunpack.c.l.b16 %v351
        %v384 = vunpack.c.l.b16 %v352
        %v385 = vunpack.c.l.b16 %v353
        %v386 = vunpack.c.l.b16 %v354
        %v387 = vunpack.c.l.b16 %v355
        %v388 = vunpack.c.l.b16 %v356
        %v389 = vunpack.c.l.b16 %v357
        %v390 = vunpack.c.l.b16 %v358
        %v391 = vunpack.c.l.b16 %v359
        %v392 = vunpack.c.l.b16 %v360
        %v393 = vunpack.c.l.b16 %v361
        %v394 = vpack.c.b16 %v379, %v378
        %v395 = vpack.c.b16 %v381, %v380
        %v396 = vpack.c.b16 %v383, %v382
        %v397 = vpack.c.b16 %v385, %v384
        %v398 = vpack.c.b16 %v387, %v386
        %v399 = vpack.c.b16 %v389, %v388
        %v400 = vpack.c.b16 %v391, %v390
        %v401 = vpack.c.b16 %v393, %v392
        %410 = vmatprep.subr.bf16.mxu0 0
        %411 = vmatpush1.bf16.msra.mxu0 %v394
        %412 = vmatprep.subr.bf16.mxu0 0
        %413 = vmatpush1.bf16.msra.mxu0 %v395
        %414 = vmatprep.subr.bf16.mxu0 0
        %415 = vmatpush1.bf16.msra.mxu0 %v396
        %416 = vmatprep.subr.bf16.mxu0 0
        %417 = vmatpush1.bf16.msra.mxu0 %v397
        %418 = vmatprep.subr.bf16.mxu0 0
        %419 = vmatpush1.bf16.msra.mxu0 %v398
        %420 = vmatprep.subr.bf16.mxu0 0
        %421 = vmatpush1.bf16.msra.mxu0 %v399
        %422 = vmatprep.subr.bf16.mxu0 0
        %423 = vmatpush1.bf16.msra.mxu0 %v400
        %424 = vmatprep.subr.bf16.mxu0 0
        %425 = vmatpush1.bf16.msra.mxu0 %v401
        %426 = vmatprep.subr.bf16.mxu0 0
        %427 = vmatpush1.bf16.msra.mxu0 0
        %428 = vmatprep.subr.bf16.mxu0 0
        %429 = vmatpush1.bf16.msra.mxu0 0
        %430 = vmatprep.subr.bf16.mxu0 0
        %431 = vmatpush1.bf16.msra.mxu0 0
        %432 = vmatprep.subr.bf16.mxu0 0
        %433 = vmatpush1.bf16.msra.mxu0 0
        %434 = vmatprep.subr.bf16.mxu0 0
        %435 = vmatpush1.bf16.msra.mxu0 0
        %436 = vmatprep.subr.bf16.mxu0 0
        %437 = vmatpush1.bf16.msra.mxu0 0
        %438 = vmatprep.subr.bf16.mxu0 0
        %439 = vmatpush1.bf16.msra.mxu0 0
        %440 = vmatprep.subr.bf16.mxu0 0
        %441 = vmatpush1.bf16.msra.mxu0 0
        %442 = vmatprep.mubr.bf16.mxu0 0
        %443 = vmatmul.mubr.bf16.gmra.mrb[0].mxu0 %v345
        %v444 = vpop.f32.mrb[0].mxu0
        %v445 = vadd.f32 0.0, %v444
        %v446 = vpop.f32.mrb[0].mxu0
        %v447 = vpop.f32.mrb[0].mxu0
        %v448 = vadd.f32 0.0, %v447
        %v449 = vpop.f32.mrb[0].mxu0
        %450 = vdwg.mxu0
        %v451 = vmax.f32 %v445, 0.0
        %v452 = vmax.f32 %v448, 0.0
        %v453 = vadd.f32 %v235, %v451
        %v454 = vadd.f32 %v236, %v452
        %455 = vst [vmem:[%s223] sm:$0xff] %v453
        %456 = vst [vmem:[%s223 + $0x8] sm:$0xff] %v454
        %s457 = sand.u32 %s97, 1
        %s458 = scalar_lea.sflag [#allocation4], %s457
        %s459 = sand.u32 %s97, 1
        %s460 = smul.addr %s459, 16
        %s461 = scalar_lea.vmem [#allocation8], %s460
        // Predicated region
        $region45: #{tpu_custom_call.1} parent=31 // pred_check
          %p462 = pneg %p107
        $region46: #{tpu_custom_call.1} parent=31 // pred_check_branch
          %464 = sbr.rel (%p462) target = $region48
        $region47: #{tpu_custom_call.1} parent=31 // pred_region
          %s465 = smul.u32 2, %s21
          %s466 = ssub.s32 5, %s465
          %p467 = scmp.lt.s32.totalorder %s466, 2
          %s468 = scalar_select %p467, %s466, 2
          %s469 = smul.u32 128, %s468
          %s471 = ssub.s32 256, %s469
          %472 = vsyncadd %s458, %s471
          %p473 = scmp.ne.s32.totalorder 0, %s469
          %s474 = smul.addr %s465, 128
          %s475 = scalar_lea.hbm %s3, %s474
          %s476 = smul.u32 8, %s468
          %s477 = sshll.u32 %s461, 4
          %s478 = int_to_ptr.vmem [resolvable:$true] %s477
          %s479 = sshll.u32 %s476, 4
          %483 = dma.vmem_to_hbm [thread:$0]  (%p473), %s478, %s479, %s475, %s458, 128, 128, 8
        $region48: #{tpu_custom_call.1} parent=31 // pred_fallthru
          _
      $region32: #{tpu_custom_call.1} parent=5 // pred_fallthru
        _
      %p484 = scmp.le.s32.totalorder 2, %s16
      // Predicated region
      $region49: #{tpu_custom_call.1} parent=5 // pred_check
        %p485 = pneg %p484
      $region50: #{tpu_custom_call.1} parent=5 // pred_check_branch
        %487 = sbr.rel (%p485) target = $region52
      $region51: #{tpu_custom_call.1} parent=5 // pred_region
        %s488 = ssub.s32 %s16, 2
        // Predicated region
        $region53: #{tpu_custom_call.1} parent=51 // pred_check
          %p489 = pneg %p113
        $region54: #{tpu_custom_call.1} parent=51 // pred_check_branch
          %491 = sbr.rel (%p489) target = $region56
        $region55: #{tpu_custom_call.1} parent=51 // pred_region
          %s492 = sand.u32 %s98, 1
          %s493 = scalar_lea.sflag [#allocation4], %s492
          %s494 = sand.u32 %s98, 1
          %s495 = smul.addr %s494, 16
          %s496 = scalar_lea.vmem [#allocation8], %s495
          %497 = dma.done %s493, 256
        $region56: #{tpu_custom_call.1} parent=51 // pred_fallthru
          _
      $region52: #{tpu_custom_call.1} parent=5 // pred_fallthru
        _
    $region6: #{tpu_custom_call.1} parent=1 // loop_footer
      %s20 = sadd.s32 1, %s16
    $region7: #{tpu_custom_call.1} parent=1 // loop_footer_branch
      %15 = sbr.rel target = $region3
    $region8: #{tpu_custom_call.1} parent=1 // loop_exit
      _
    %498 = vsyncpa [#allocation3], 1
    %s499 = scalar_lea.sflag [#allocation3], 1
    %500 = vsyncpa %s499, 1
    %501 = vsyncpa [#allocation6], 1
    %502 = vsyncpa [#allocation4], 1
    %s503 = scalar_lea.sflag [#allocation4], 1
    %504 = vsyncpa %s503, 1

</llo_original>
